<compile_context>
chip_gen: v7x
topology: tpu7x:2x2x1
jax: 0.10.0
libtpu: 0.0.40
codegen_flags: <defaults>
</compile_context>

<pallas_src>
import jax
import jax.numpy as jnp
from jax.experimental import pallas as pl
from jax.experimental.pallas import tpu as pltpu

FEATURES = 22
HIDDEN = 10
OUT_DIM = 2
BATCH = 2          # forward() requires params.shape[0] == 2 to unpack (mu, sigma)

LANES = 128        # vreg lane width
SUBLANES = 8       # f32 vreg sublanes
DEFAULT_TM = 256   # default rows per grid step (multiple of 256 for v6e/v7x MXU)

# Row layout of the packed parameter slab (all offsets are 8-aligned).
W1_ROW = 0                    # rows   0..127 : W1  (22 x 10 real, zero padded)
B1_ROW = 128                  # row    128    : b1  (10 real lanes)
W2_ROW = 136                  # rows 136..263 : W2  (10 x 2 real, zero padded)
B2_ROW = 264                  # row    264    : b2  (2 real lanes)
P_ROWS = 272                  # total rows (multiple of 8)


def _round_up(x, m):
    return ((x + m - 1) // m) * m


def emnet_kernel(x_ref, p_ref, o_ref):
    """One grid step = one (TM, 128) block of stacked (mu, sigma) rows.

    x_ref: [TM, 128]   even rows = mu inputs, odd rows = sigma inputs,
                       lanes 0..21 = features (rest zero padded).
    p_ref: [272, 128]  packed (W1 | b1 | W2 | b2) slab, zero padded.
    o_ref: [TM, 128]   even rows = mu, odd rows = (sigma + 1)^2 (lanes 0..1 valid).
    """
    x = x_ref[...]                                 # [TM, 128]
    w1 = p_ref[W1_ROW:W1_ROW + LANES, :]           # [128, 128] (static slices: free)
    b1 = p_ref[B1_ROW:B1_ROW + 1, :]               # [1, 128]
    w2 = p_ref[W2_ROW:W2_ROW + LANES, :]           # [128, 128]
    b2 = p_ref[B2_ROW:B2_ROW + 1, :]               # [1, 128]

    # Layer 1: Linear(22 -> 10) + Sigmoid.  Zero padding of x / W1 keeps the
    # full-vreg dot exact.  Pad lanes of h become sigmoid(0) = 0.5, but W2's
    # pad rows are zero so they contribute nothing to layer 2.
    h = jax.nn.sigmoid(jnp.dot(x, w1, preferred_element_type=jnp.float32) + b1)

    # Layer 2: Linear(10 -> 2) + ReLU.
    p = jnp.maximum(jnp.dot(h, w2, preferred_element_type=jnp.float32) + b2, 0.0)

    # (sigma + 1)^2 applied to every odd (sigma) row; TM is a multiple of 8 so
    # block-local parity equals global parity.  One full-tile lane-dense store.
    row = jax.lax.broadcasted_iota(jnp.int32, p.shape, 0)
    o_ref[...] = jnp.where((row & 1) == 1, (p + 1.0) ** 2, p)


def pack_params(w1, b1, w2, b2):
    """Pack (W1, b1, W2, b2) into one zero-padded [272, 128] f32 slab (do once)."""
    p = jnp.zeros((P_ROWS, LANES), jnp.float32)
    p = p.at[W1_ROW:W1_ROW + FEATURES, 0:HIDDEN].set(w1.astype(jnp.float32))
    p = p.at[B1_ROW, 0:HIDDEN].set(b1.reshape(HIDDEN).astype(jnp.float32))
    p = p.at[W2_ROW:W2_ROW + HIDDEN, 0:OUT_DIM].set(w2.astype(jnp.float32))
    p = p.at[B2_ROW, 0:OUT_DIM].set(b2.reshape(OUT_DIM).astype(jnp.float32))
    return p


def emnet_forward_batched(x, packed_params, tm=DEFAULT_TM):
    """x: [N, 2, 22] (N independent 2-row samples) ->
       (mu [N, 1, 2], (sigma + 1)^2 [N, 1, 2])."""
    n = x.shape[0]
    assert x.shape == (n, BATCH, FEATURES)
    rows = n * BATCH

    # Stack all samples along the sublane axis: [2N, 22], then one fused pad
    # to [padded_rows, 128].  Block rows (TM) must be a multiple of 8.
    tm_eff = _round_up(min(tm, _round_up(rows, SUBLANES)), SUBLANES)
    padded_rows = _round_up(rows, tm_eff)
    x2 = x.reshape(rows, FEATURES).astype(jnp.float32)
    xp = jnp.pad(x2, ((0, padded_rows - rows), (0, LANES - FEATURES)))

    grid = (padded_rows // tm_eff,)
    out = pl.pallas_call(
        emnet_kernel,
        out_shape=jax.ShapeDtypeStruct((padded_rows, LANES), jnp.float32),
        grid=grid,
        in_specs=[
            pl.BlockSpec((tm_eff, LANES), lambda i: (i, 0)),
            # Constant block index -> the parameter slab stays resident in VMEM
            # and is DMA'd only once for the whole grid.
            pl.BlockSpec((P_ROWS, LANES), lambda i: (0, 0)),
        ],
        out_specs=pl.BlockSpec((tm_eff, LANES), lambda i: (i, 0)),
        compiler_params=pltpu.CompilerParams(
            dimension_semantics=("parallel",)),
    )(xp, packed_params)

    # Free slices in the wrapper: drop pad rows / lanes, split mu vs sigma.
    res = out[:rows, 0:OUT_DIM].reshape(n, BATCH, OUT_DIM)
    mu = res[:, 0:1, :]
    sig2 = res[:, 1:2, :]          # (sigma + 1)^2 already applied in-kernel
    return mu, sig2


def emnet_forward(x, packed_params):
    """Module-faithful interface: x [2, 22] -> (mu [1, 2], (sigma + 1)^2 [1, 2]).

    NOTE: for a one-off 2x22 evaluation a plain-jnp forward would be cheaper
    (dispatch dominates), but the Pallas path is kept so the module forward
    itself is the kernel; the batched entry point is the amortized fast path.
    """
    assert x.shape == (BATCH, FEATURES)
    mu, sig2 = emnet_forward_batched(x[None], packed_params)
    return mu[0], sig2[0]


def init_params():
    # Deterministic synthetic parameters (PyTorch-style uniform(+-1/sqrt(fan_in))).
    k1, k2, k3, k4 = jax.random.split(jax.random.PRNGKey(42), 4)
    lim1 = 1.0 / jnp.sqrt(FEATURES)
    lim2 = 1.0 / jnp.sqrt(HIDDEN)
    w1 = jax.random.uniform(k1, (FEATURES, HIDDEN), jnp.float32, -lim1, lim1)
    b1 = jax.random.uniform(k2, (1, HIDDEN), jnp.float32, -lim1, lim1)
    w2 = jax.random.uniform(k3, (HIDDEN, OUT_DIM), jnp.float32, -lim2, lim2)
    b2 = jax.random.uniform(k4, (1, OUT_DIM), jnp.float32, -lim2, lim2)
    return w1, b1, w2, b2


def emnet_reference(x, w1, b1, w2, b2):
    h = jax.nn.sigmoid(x @ w1 + b1)
    p = jnp.maximum(h @ w2 + b2, 0.0)
    mu = p[..., 0:1, :]
    sigma = p[..., 1:2, :]
    return mu, (sigma + 1.0) ** 2


if __name__ == "__main__":
    kx, kxb, kxc = jax.random.split(jax.random.PRNGKey(0), 3)
    w1, b1, w2, b2 = init_params()
    packed = pack_params(w1, b1, w2, b2)   # pack / pad once, reuse across calls

    # Guard the layer-2 correctness assumption: W2 pad rows must be exactly 0
    # (the sigmoid(0)=0.5 pad lanes of h must contribute nothing).
    assert float(jnp.abs(packed[W2_ROW + HIDDEN:W2_ROW + LANES, :]).sum()) == 0.0

    # Single module-style forward: x [2, 22] -> (mu [1, 2], (sigma + 1)^2 [1, 2]).
    x = jax.random.normal(kx, (BATCH, FEATURES), jnp.float32)
    mu, sig2 = jax.block_until_ready(emnet_forward(x, packed))
    mu_ref, sig2_ref = emnet_reference(x, w1, b1, w2, b2)
    assert mu.shape == (1, OUT_DIM) and sig2.shape == (1, OUT_DIM)
    assert jnp.allclose(mu, mu_ref, atol=1e-5, rtol=1e-4)
    assert jnp.allclose(sig2, sig2_ref, atol=1e-5, rtol=1e-4)

    # Batched (single grid step): 8 samples -> one 16x128 block.
    n_small = 8
    xb = jax.random.normal(kxb, (n_small, BATCH, FEATURES), jnp.float32)
    mub, sig2b = jax.block_until_ready(emnet_forward_batched(xb, packed))
    mub_ref, sig2b_ref = emnet_reference(xb, w1, b1, w2, b2)
    assert mub.shape == (n_small, 1, OUT_DIM) and sig2b.shape == (n_small, 1, OUT_DIM)
    assert jnp.allclose(mub, mub_ref, atol=1e-5, rtol=1e-4)
    assert jnp.allclose(sig2b, sig2b_ref, atol=1e-5, rtol=1e-4)

    # Batched (multi grid step): 200 samples -> 400 rows -> two 256x128 blocks,
    # exercising the parallel grid (two TensorCores on v7x).
    n_big = 200
    xc = jax.random.normal(kxc, (n_big, BATCH, FEATURES), jnp.float32)
    muc, sig2c = jax.block_until_ready(emnet_forward_batched(xc, packed))
    muc_ref, sig2c_ref = emnet_reference(xc, w1, b1, w2, b2)
    assert muc.shape == (n_big, 1, OUT_DIM) and sig2c.shape == (n_big, 1, OUT_DIM)
    assert jnp.allclose(muc, muc_ref, atol=1e-5, rtol=1e-4)
    assert jnp.allclose(sig2c, sig2c_ref, atol=1e-5, rtol=1e-4)

    print("KERNEL_OK")
</pallas_src>

<mosaic_0001>
module attributes {stable_mosaic.version = 11 : i64} {
  func.func @emnet_kernel(%arg0: i32, %arg1: memref<8x128xf32, #tpu.memory_space<vmem>>, %arg2: memref<272x128xf32, #tpu.memory_space<vmem>>, %arg3: memref<8x128xf32, #tpu.memory_space<vmem>>) attributes {dimension_semantics = [#tpu.dimension_semantics<parallel>], iteration_bounds = array<i64: 1>, scalar_prefetch = 0 : i64, scratch_operands = 0 : i64, tpu.core_type = #tpu.core_type<tc>, window_params = [{transform_indices = @transform_0, window_bounds = array<i64: 8, 128>}, {pipeline_mode = #tpu.pipeline_mode<synchronous>, transform_indices = @transform_1, window_bounds = array<i64: 272, 128>}, {transform_indices = @transform_2, window_bounds = array<i64: 8, 128>}]} {
    %c0 = arith.constant 0 : index
    %c0_0 = arith.constant 0 : index
    %0 = vector.load %arg1[%c0, %c0_0] : memref<8x128xf32, #tpu.memory_space<vmem>>, vector<8x128xf32>
    %c0_1 = arith.constant 0 : index
    %c0_2 = arith.constant 0 : index
    %1 = vector.load %arg2[%c0_1, %c0_2] : memref<272x128xf32, #tpu.memory_space<vmem>>, vector<128x128xf32>
    %c128 = arith.constant 128 : index
    %c0_3 = arith.constant 0 : index
    %2 = vector.load %arg2[%c128, %c0_3] : memref<272x128xf32, #tpu.memory_space<vmem>>, vector<1x128xf32>
    %c136 = arith.constant 136 : index
    %c0_4 = arith.constant 0 : index
    %3 = vector.load %arg2[%c136, %c0_4] : memref<272x128xf32, #tpu.memory_space<vmem>>, vector<128x128xf32>
    %c264 = arith.constant 264 : index
    %c0_5 = arith.constant 0 : index
    %4 = vector.load %arg2[%c264, %c0_5] : memref<272x128xf32, #tpu.memory_space<vmem>>, vector<1x128xf32>
    %cst = arith.constant dense<0.000000e+00> : vector<8x128xf32>
    %5 = tpu.matmul %0, %1, %cst {dimension_numbers = #tpu.dot_dimension_numbers<[1], [0], [0], [1], [0, 0, 1, 1], [], []>} : vector<8x128xf32>, vector<128x128xf32>, vector<8x128xf32> -> vector<8x128xf32>
    %6 = vector.broadcast %2 : vector<1x128xf32> to vector<8x128xf32>
    %7 = arith.addf %5, %6 : vector<8x128xf32>
    %8 = arith.negf %7 : vector<8x128xf32>
    %9 = math.exp %8 : vector<8x128xf32>
    %cst_6 = arith.constant 1.000000e+00 : f32
    %10 = vector.broadcast %cst_6 : f32 to vector<8x128xf32>
    %11 = arith.addf %10, %9 : vector<8x128xf32>
    %12 = arith.divf %10, %11 : vector<8x128xf32>
    %cst_7 = arith.constant dense<0.000000e+00> : vector<8x128xf32>
    %13 = tpu.matmul %12, %3, %cst_7 {dimension_numbers = #tpu.dot_dimension_numbers<[1], [0], [0], [1], [0, 0, 1, 1], [], []>} : vector<8x128xf32>, vector<128x128xf32>, vector<8x128xf32> -> vector<8x128xf32>
    %14 = vector.broadcast %4 : vector<1x128xf32> to vector<8x128xf32>
    %15 = arith.addf %13, %14 : vector<8x128xf32>
    %cst_8 = arith.constant 0.000000e+00 : f32
    %16 = vector.broadcast %cst_8 : f32 to vector<8x128xf32>
    %17 = arith.maximumf %15, %16 : vector<8x128xf32>
    %18 = tpu.iota {dimensions = array<i32: 0>} : vector<8x128xi32>
    %c1_i32 = arith.constant 1 : i32
    %19 = vector.broadcast %c1_i32 : i32 to vector<8x128xi32>
    %20 = arith.andi %18, %19 : vector<8x128xi32>
    %c1_i32_9 = arith.constant 1 : i32
    %21 = vector.broadcast %c1_i32_9 : i32 to vector<8x128xi32>
    %22 = arith.cmpi eq, %20, %21 : vector<8x128xi32>
    %cst_10 = arith.constant 1.000000e+00 : f32
    %23 = vector.broadcast %cst_10 : f32 to vector<8x128xf32>
    %24 = arith.addf %17, %23 : vector<8x128xf32>
    %25 = arith.mulf %24, %24 : vector<8x128xf32>
    %26 = arith.select %22, %25, %17 : vector<8x128xi1>, vector<8x128xf32>
    %c0_11 = arith.constant 0 : index
    %c0_12 = arith.constant 0 : index
    %27 = vector.load %arg3[%c0_11, %c0_12] : memref<8x128xf32, #tpu.memory_space<vmem>>, vector<8x128xf32>
    tpu.vector_store %arg3[%c0_11, %c0_12], %26 {strides = array<i32>} : memref<8x128xf32, #tpu.memory_space<vmem>>, vector<8x128xf32>,
    return
  }
  func.func @transform_0(%arg0: i32) -> (i32, i32) {
    %c0_i32 = arith.constant 0 : i32
    %c0_i32_0 = arith.constant 0 : i32
    return %arg0, %c0_i32 : i32, i32
  }
  func.func @transform_1(%arg0: i32) -> (i32, i32) {
    %c0_i32 = arith.constant 0 : i32
    %c0_i32_0 = arith.constant 0 : i32
    %c0_i32_1 = arith.constant 0 : i32
    return %c0_i32, %c0_i32_0 : i32, i32
  }
  func.func @transform_2(%arg0: i32) -> (i32, i32) {
    %c0_i32 = arith.constant 0 : i32
    %c0_i32_0 = arith.constant 0 : i32
    return %arg0, %c0_i32 : i32, i32
  }
}

</mosaic_0001>

<llo_original>
// kernel: tpu_custom_call.1
$region0: #{tpu_custom_call.1}
  #allocation0 [shape = 'u32[]', space=smem, size = 0x4, offset = 0x4, fixed_abs, tag = 'smem constant byte address 0x4 - core index']
  #allocation1 [shape = 'u32[144,128]{1,0:T(1,128)}', space=vmem, size = 0x12000, scoped, tag = 'internal scratch']
  %s0 = inlined_call_operand.hbm [shape: f32[8,128], index: 0, kind: input, shape index: {}]
  %s1 = inlined_call_operand.hbm [shape: f32[272,128], index: 1, kind: input, shape index: {}]
  %s2 = inlined_call_operand.hbm [shape: f32[8,128], index: 2, kind: output, shape index: {}]
  %s3 = sld [smem:[#allocation0]]
  $region26: #{tpu_custom_call.1} parent=0
    _
  %s5 = ssub.s32 1, %s3
  %s6 = scalar_select 0, %s5, %s3
  $region1: #{tpu_custom_call.1} parent=0
    #allocation2 [shape = 'u8[4096]{0}', space=vmem, size = 0x1000, scoped, tag = 'input window, operand 0, single buffered']
    #allocation3 [shape = 's32[1]{0}', space=sflag, size = 0x4, scoped, tag = 'scoped memory for tpu_custom_call.1']
    #allocation4 [shape = 's32[1]{0}', space=sflag, size = 0x4, scoped, tag = 'scoped memory for tpu_custom_call.1']
    #allocation5 [shape = 'u8[139264]{0}', space=vmem, size = 0x22000, scoped, tag = 'input window, operand 1, single buffered']
    #allocation6 [shape = 's32[1]{0}', space=sflag, size = 0x4, scoped, tag = 'scoped memory for tpu_custom_call.1']
    #allocation7 [shape = 'u8[4096]{0}', space=vmem, size = 0x1000, scoped, tag = 'output window, operand 0, single buffered']
    %7 = vsyncpa [#allocation3], 0
    %8 = vsyncpa [#allocation6], 0
    %9 = vsyncpa [#allocation4], 0
    // Predicated region
    $region2: #{tpu_custom_call.1} parent=1 // pred_check
      _
    $region3: #{tpu_custom_call.1} parent=1 // pred_check_branch
      %11 = sbr.rel (0) target = $region5
    $region4: #{tpu_custom_call.1} parent=1 // pred_region
      %s13 = ssub.s32 128, 128
      %14 = vsyncadd [#allocation3], %s13
      %s16 = sshll.u32 [#allocation2], 4
      %s17 = int_to_ptr.vmem [resolvable:$true] %s16
      %19 = dma.hbm_to_vmem [thread:$0]  %s0, 128, %s17, [#allocation3]
    $region5: #{tpu_custom_call.1} parent=1 // pred_fallthru
      _
    // Predicated region
    $region6: #{tpu_custom_call.1} parent=1 // pred_check
      _
    $region7: #{tpu_custom_call.1} parent=1 // pred_check_branch
      %21 = sbr.rel (0) target = $region9
    $region8: #{tpu_custom_call.1} parent=1 // pred_region
      %s23 = ssub.s32 4352, 4352
      %24 = vsyncadd [#allocation6], %s23
      %s25 = sshll.u32 [#allocation5], 4
      %s26 = int_to_ptr.vmem [resolvable:$true] %s25
      %31 = dma.hbm_to_vmem [thread:$0]  %s1, 4352, %s26, [#allocation6], 128, 128, 8
    $region9: #{tpu_custom_call.1} parent=1 // pred_fallthru
      _
    // Predicated region
    $region10: #{tpu_custom_call.1} parent=1 // pred_check
      _
    $region11: #{tpu_custom_call.1} parent=1 // pred_check_branch
      %33 = sbr.rel (0) target = $region13
    $region12: #{tpu_custom_call.1} parent=1 // pred_region
      %34 = dma.done [#allocation3], 128
    $region13: #{tpu_custom_call.1} parent=1 // pred_fallthru
      _
    // Predicated region
    $region14: #{tpu_custom_call.1} parent=1 // pred_check
      _
    $region15: #{tpu_custom_call.1} parent=1 // pred_check_branch
      %36 = sbr.rel (0) target = $region17
    $region16: #{tpu_custom_call.1} parent=1 // pred_region
      %37 = dma.done [#allocation6], 4352
    $region17: #{tpu_custom_call.1} parent=1 // pred_fallthru
      _
    %v38 = vld [vmem:[#allocation2] sm:$0xff]
    %v39 = vld [vmem:[#allocation5] sm:$0xff]
    %v40 = vld [vmem:[#allocation5 + $0x8] sm:$0xff]
    %v41 = vld [vmem:[#allocation5 + $0x10] sm:$0xff]
    %v42 = vld [vmem:[#allocation5 + $0x18] sm:$0xff]
    %v43 = vld [vmem:[#allocation5 + $0x20] sm:$0xff]
    %v44 = vld [vmem:[#allocation5 + $0x28] sm:$0xff]
    %v45 = vld [vmem:[#allocation5 + $0x30] sm:$0xff]
    %v46 = vld [vmem:[#allocation5 + $0x38] sm:$0xff]
    %v47 = vld [vmem:[#allocation5 + $0x40] sm:$0xff]
    %v48 = vld [vmem:[#allocation5 + $0x48] sm:$0xff]
    %v49 = vld [vmem:[#allocation5 + $0x50] sm:$0xff]
    %v50 = vld [vmem:[#allocation5 + $0x58] sm:$0xff]
    %v51 = vld [vmem:[#allocation5 + $0x60] sm:$0xff]
    %v52 = vld [vmem:[#allocation5 + $0x68] sm:$0xff]
    %v53 = vld [vmem:[#allocation5 + $0x70] sm:$0xff]
    %v54 = vld [vmem:[#allocation5 + $0x78] sm:$0xff]
    %v55 = vld [vmem:[#allocation5 + $0x80] sm:$0x1]
    %v56 = vld [vmem:[#allocation5 + $0x88] sm:$0xff]
    %v57 = vld [vmem:[#allocation5 + $0x90] sm:$0xff]
    %v58 = vld [vmem:[#allocation5 + $0x98] sm:$0xff]
    %v59 = vld [vmem:[#allocation5 + $0xa0] sm:$0xff]
    %v60 = vld [vmem:[#allocation5 + $0xa8] sm:$0xff]
    %v61 = vld [vmem:[#allocation5 + $0xb0] sm:$0xff]
    %v62 = vld [vmem:[#allocation5 + $0xb8] sm:$0xff]
    %v63 = vld [vmem:[#allocation5 + $0xc0] sm:$0xff]
    %v64 = vld [vmem:[#allocation5 + $0xc8] sm:$0xff]
    %v65 = vld [vmem:[#allocation5 + $0xd0] sm:$0xff]
    %v66 = vld [vmem:[#allocation5 + $0xd8] sm:$0xff]
    %v67 = vld [vmem:[#allocation5 + $0xe0] sm:$0xff]
    %v68 = vld [vmem:[#allocation5 + $0xe8] sm:$0xff]
    %v69 = vld [vmem:[#allocation5 + $0xf0] sm:$0xff]
    %v70 = vld [vmem:[#allocation5 + $0xf8] sm:$0xff]
    %v71 = vld [vmem:[#allocation5 + $0x100] sm:$0xff]
    %v72 = vld [vmem:[#allocation5 + $0x108] sm:$0x1]
    %v73 = vlaneseq
    %v74 = vshrl.u32 %v73, 7
    %v75 = vsub.s32 0, %v74
    %v76 = vrot.slane %v55, %v75
    %77 = vmatprep.subr.mxu0 0.0
    %78 = vmatpush1.msra.mxu0 %v39
    %79 = vmatprep.subr.mxu0 0.0
    %80 = vmatpush1.msra.mxu0 %v40
    %81 = vmatprep.subr.mxu0 0.0
    %82 = vmatpush1.msra.mxu0 %v41
    %83 = vmatprep.subr.mxu0 0.0
    %84 = vmatpush1.msra.mxu0 %v42
    %85 = vmatprep.subr.mxu0 0.0
    %86 = vmatpush1.msra.mxu0 %v43
    %87 = vmatprep.subr.mxu0 0.0
    %88 = vmatpush1.msra.mxu0 %v44
    %89 = vmatprep.subr.mxu0 0.0
    %90 = vmatpush1.msra.mxu0 %v45
    %91 = vmatprep.subr.mxu0 0.0
    %92 = vmatpush1.msra.mxu0 %v46
    %93 = vmatprep.subr.mxu0 0.0
    %94 = vmatpush1.msra.mxu0 %v47
    %95 = vmatprep.subr.mxu0 0.0
    %96 = vmatpush1.msra.mxu0 %v48
    %97 = vmatprep.subr.mxu0 0.0
    %98 = vmatpush1.msra.mxu0 %v49
    %99 = vmatprep.subr.mxu0 0.0
    %100 = vmatpush1.msra.mxu0 %v50
    %101 = vmatprep.subr.mxu0 0.0
    %102 = vmatpush1.msra.mxu0 %v51
    %103 = vmatprep.subr.mxu0 0.0
    %104 = vmatpush1.msra.mxu0 %v52
    %105 = vmatprep.subr.mxu0 0.0
    %106 = vmatpush1.msra.mxu0 %v53
    %107 = vmatprep.subr.mxu0 0.0
    %108 = vmatpush1.msra.mxu0 %v54
    %109 = vmatprep.subr.mxu0 0.0
    %110 = vmatpush1.msra.mxu0 0.0
    %111 = vmatprep.subr.mxu0 0.0
    %112 = vmatpush1.msra.mxu0 0.0
    %113 = vmatprep.subr.mxu0 0.0
    %114 = vmatpush1.msra.mxu0 0.0
    %115 = vmatprep.subr.mxu0 0.0
    %116 = vmatpush1.msra.mxu0 0.0
    %117 = vmatprep.subr.mxu0 0.0
    %118 = vmatpush1.msra.mxu0 0.0
    %119 = vmatprep.subr.mxu0 0.0
    %120 = vmatpush1.msra.mxu0 0.0
    %121 = vmatprep.subr.mxu0 0.0
    %122 = vmatpush1.msra.mxu0 0.0
    %123 = vmatprep.subr.mxu0 0.0
    %124 = vmatpush1.msra.mxu0 0.0
    %125 = vmatprep.subr.mxu0 0.0
    %126 = vmatpush1.msra.mxu0 0.0
    %127 = vmatprep.subr.mxu0 0.0
    %128 = vmatpush1.msra.mxu0 0.0
    %129 = vmatprep.subr.mxu0 0.0
    %130 = vmatpush1.msra.mxu0 0.0
    %131 = vmatprep.subr.mxu0 0.0
    %132 = vmatpush1.msra.mxu0 0.0
    %133 = vmatprep.subr.mxu0 0.0
    %134 = vmatpush1.msra.mxu0 0.0
    %135 = vmatprep.subr.mxu0 0.0
    %136 = vmatpush1.msra.mxu0 0.0
    %137 = vmatprep.subr.mxu0 0.0
    %138 = vmatpush1.msra.mxu0 0.0
    %139 = vmatprep.subr.mxu0 0.0
    %140 = vmatpush1.msra.mxu0 0.0
    %141 = vmatprep.mubr.f32.mxu0 0.0
    %142 = vmatmul.mubr.f32.gmra.mrb[0].mxu0 %v38
    %v143 = vpop.f32.mrb[0].mxu0
    %v144 = vadd.f32 %v76, %v143
    %v145 = vpop.f32.mrb[0].mxu0
    %146 = vdwg.mxu0
    %v147 = vxor.u32 %v144, 2147483648
    %v148 = vmul.f32 %v147, 1.442695
    %v149 = vpow.pop %v148
    %v150 = vadd.f32 %v149, 1.0
    %v151 = vrcp.pop %v150
    %v152 = vmul.f32 1.0, %v151
    %v153 = vlaneseq
    %v154 = vshrl.u32 %v153, 7
    %v155 = vsub.s32 0, %v154
    %v156 = vrot.slane %v72, %v155
    %157 = vmatprep.subr.mxu0 0.0
    %158 = vmatpush1.msra.mxu0 %v56
    %159 = vmatprep.subr.mxu0 0.0
    %160 = vmatpush1.msra.mxu0 %v57
    %161 = vmatprep.subr.mxu0 0.0
    %162 = vmatpush1.msra.mxu0 %v58
    %163 = vmatprep.subr.mxu0 0.0
    %164 = vmatpush1.msra.mxu0 %v59
    %165 = vmatprep.subr.mxu0 0.0
    %166 = vmatpush1.msra.mxu0 %v60
    %167 = vmatprep.subr.mxu0 0.0
    %168 = vmatpush1.msra.mxu0 %v61
    %169 = vmatprep.subr.mxu0 0.0
    %170 = vmatpush1.msra.mxu0 %v62
    %171 = vmatprep.subr.mxu0 0.0
    %172 = vmatpush1.msra.mxu0 %v63
    %173 = vmatprep.subr.mxu0 0.0
    %174 = vmatpush1.msra.mxu0 %v64
    %175 = vmatprep.subr.mxu0 0.0
    %176 = vmatpush1.msra.mxu0 %v65
    %177 = vmatprep.subr.mxu0 0.0
    %178 = vmatpush1.msra.mxu0 %v66
    %179 = vmatprep.subr.mxu0 0.0
    %180 = vmatpush1.msra.mxu0 %v67
    %181 = vmatprep.subr.mxu0 0.0
    %182 = vmatpush1.msra.mxu0 %v68
    %183 = vmatprep.subr.mxu0 0.0
    %184 = vmatpush1.msra.mxu0 %v69
    %185 = vmatprep.subr.mxu0 0.0
    %186 = vmatpush1.msra.mxu0 %v70
    %187 = vmatprep.subr.mxu0 0.0
    %188 = vmatpush1.msra.mxu0 %v71
    %189 = vmatprep.subr.mxu0 0.0
    %190 = vmatpush1.msra.mxu0 0.0
    %191 = vmatprep.subr.mxu0 0.0
    %192 = vmatpush1.msra.mxu0 0.0
    %193 = vmatprep.subr.mxu0 0.0
    %194 = vmatpush1.msra.mxu0 0.0
    %195 = vmatprep.subr.mxu0 0.0
    %196 = vmatpush1.msra.mxu0 0.0
    %197 = vmatprep.subr.mxu0 0.0
    %198 = vmatpush1.msra.mxu0 0.0
    %199 = vmatprep.subr.mxu0 0.0
    %200 = vmatpush1.msra.mxu0 0.0
    %201 = vmatprep.subr.mxu0 0.0
    %202 = vmatpush1.msra.mxu0 0.0
    %203 = vmatprep.subr.mxu0 0.0
    %204 = vmatpush1.msra.mxu0 0.0
    %205 = vmatprep.subr.mxu0 0.0
    %206 = vmatpush1.msra.mxu0 0.0
    %207 = vmatprep.subr.mxu0 0.0
    %208 = vmatpush1.msra.mxu0 0.0
    %209 = vmatprep.subr.mxu0 0.0
    %210 = vmatpush1.msra.mxu0 0.0
    %211 = vmatprep.subr.mxu0 0.0
    %212 = vmatpush1.msra.mxu0 0.0
    %213 = vmatprep.subr.mxu0 0.0
    %214 = vmatpush1.msra.mxu0 0.0
    %215 = vmatprep.subr.mxu0 0.0
    %216 = vmatpush1.msra.mxu0 0.0
    %217 = vmatprep.subr.mxu0 0.0
    %218 = vmatpush1.msra.mxu0 0.0
    %219 = vmatprep.subr.mxu0 0.0
    %220 = vmatpush1.msra.mxu0 0.0
    %221 = vmatprep.mubr.f32.mxu0 0.0
    %222 = vmatmul.mubr.f32.gmra.mrb[0].mxu0 %v152
    %v223 = vpop.f32.mrb[0].mxu0
    %v224 = vadd.f32 %v156, %v223
    %v225 = vpop.f32.mrb[0].mxu0
    %226 = vdwg.mxu0
    %v227 = vmax.f32 %v224, 0.0
    %v228 = vlaneseq
    %v229 = vshrl.u32 %v228, 7
    %v230 = vand.u32 %v229, 1
    %vm231 = vcmp.eq.s32.totalorder %v230, 1
    %v232 = vadd.f32 %v227, 1.0
    %v233 = vmul.f32 %v232, %v232
    %v234 = vsel %vm231, %v233, %v227
    %235 = vst [vmem:[#allocation7] sm:$0xff] %v234
    // Predicated region
    $region18: #{tpu_custom_call.1} parent=1 // pred_check
      _
    $region19: #{tpu_custom_call.1} parent=1 // pred_check_branch
      %237 = sbr.rel (0) target = $region21
    $region20: #{tpu_custom_call.1} parent=1 // pred_region
      %s239 = ssub.s32 128, 128
      %240 = vsyncadd [#allocation4], %s239
      %s242 = sshll.u32 [#allocation7], 4
      %s243 = int_to_ptr.vmem [resolvable:$true] %s242
      %245 = dma.vmem_to_hbm [thread:$0]  %s243, 128, %s2, [#allocation4]
    $region21: #{tpu_custom_call.1} parent=1 // pred_fallthru
      _
    // Predicated region
    $region22: #{tpu_custom_call.1} parent=1 // pred_check
      _
    $region23: #{tpu_custom_call.1} parent=1 // pred_check_branch
      %247 = sbr.rel (0) target = $region25
    $region24: #{tpu_custom_call.1} parent=1 // pred_region
      %248 = dma.done [#allocation4], 128
    $region25: #{tpu_custom_call.1} parent=1 // pred_fallthru
      _
    %249 = vsyncpa [#allocation3], 1
    %250 = vsyncpa [#allocation6], 1
    %251 = vsyncpa [#allocation4], 1

</llo_original>
